<compile_context>
chip_gen: v7x
topology: tpu7x:2x2x1
jax: 0.10.0
libtpu: 0.0.40
codegen_flags: <defaults>
</compile_context>

<pallas_src>
import jax
import jax.numpy as jnp
from jax import lax
from jax.experimental import pallas as pl
from jax.experimental.pallas import tpu as pltpu


def _pick_tile(dim, preferred, align):
    """Largest multiple of `align` <= preferred that divides `dim`; else full dim."""
    t = min(preferred, dim)
    t = (t // align) * align
    while t >= align:
        if dim % t == 0:
            return t
        t -= align
    return dim


# ---------------------------------------------------------------------------
# Kernel 1: ASTP  (attentive statistics pooling)
# ---------------------------------------------------------------------------
def _astp_kernel(x_ref, w1_ref, b1_ref, w2_ref, b2_ref, out_ref):
    # x_ref block: (1, T, D)  (time on sublanes, channels lane-dense)
    x = x_ref[0].astype(jnp.float32)                                   # (T, D)
    a = jnp.tanh(
        jnp.dot(x, w1_ref[...], preferred_element_type=jnp.float32) + b1_ref[...])
    e = jnp.dot(a, w2_ref[...], preferred_element_type=jnp.float32) + b2_ref[...]
    # softmax over time (axis 0)
    e = e - jnp.max(e, axis=0, keepdims=True)
    w = jnp.exp(e)
    w = w / jnp.sum(w, axis=0, keepdims=True)
    mu = jnp.sum(x * w, axis=0, keepdims=True)                         # (1, D)
    ex2 = jnp.sum(x * x * w, axis=0, keepdims=True)                    # (1, D)
    sg = jnp.sqrt(jnp.maximum(ex2 - mu * mu, 1e-5))                    # (1, D)
    out_ref[0] = jnp.concatenate([mu, sg], axis=0).astype(out_ref.dtype)


def astp_pool(x, w1, b1, w2, b2):
    """ASTP.forward.  x: (B, D, T); w1: (Bn, D); w2: (D, Bn).  Returns (B, 2*D)."""
    B, D, T = x.shape
    Bn = w1.shape[0]

    # Present time-major / channel-lane-dense layout to the kernel (layout plumbing
    # done once outside the kernel; the in-kernel reductions then target the lane
    # axis for the output and the sublane axis for the time softmax).
    x_t = jnp.transpose(x, (0, 2, 1))           # (B, T, D)
    w1t = jnp.transpose(w1)                     # (D, Bn)
    w2t = jnp.transpose(w2)                     # (Bn, D)

    out = pl.pallas_call(
        _astp_kernel,
        out_shape=jax.ShapeDtypeStruct((B, 2, D), jnp.float32),
        grid=(B,),
        in_specs=[
            pl.BlockSpec((1, T, D), lambda b: (b, 0, 0)),
            pl.BlockSpec((D, Bn), lambda b: (0, 0)),
            pl.BlockSpec((1, Bn), lambda b: (0, 0)),
            pl.BlockSpec((Bn, D), lambda b: (0, 0)),
            pl.BlockSpec((1, D), lambda b: (0, 0)),
        ],
        out_specs=pl.BlockSpec((1, 2, D), lambda b: (b, 0, 0)),
        compiler_params=pltpu.CompilerParams(dimension_semantics=("parallel",)),
    )(x_t, w1t, b1.reshape(1, Bn), w2t, b2.reshape(1, D))
    return out.reshape(B, 2 * D)


# ---------------------------------------------------------------------------
# Kernel 2: SpeakerEmbedding  (BN1d -> Linear -> BN1d, BN folded to one affine)
# ---------------------------------------------------------------------------
def _linear_bias_kernel(x_ref, w_ref, b_ref, out_ref):
    y = jnp.dot(x_ref[...], w_ref[...], preferred_element_type=jnp.float32)
    out_ref[...] = (y + b_ref[...]).astype(out_ref.dtype)


def fold_speaker_embedding_params(p, eps=1e-5):
    """Fold BN1d -> Linear -> BN1d (inference mode) into one (Wf, bf)."""
    a1 = p["bn1_gamma"] / jnp.sqrt(p["bn1_var"] + eps)
    c1 = p["bn1_beta"] - p["bn1_mean"] * a1
    a2 = p["bn2_gamma"] / jnp.sqrt(p["bn2_var"] + eps)
    c2 = p["bn2_beta"] - p["bn2_mean"] * a2
    Wt = p["fc_w"].T                                   # (in_dim, embed)
    Wf = (a1[:, None] * Wt) * a2[None, :]
    bf = (c1 @ Wt + p["fc_b"]) * a2 + c2
    return Wf, bf


def speaker_embedding(stats, Wf, bf, tm=None):
    """SpeakerEmbedding.forward with folded BN.  stats: (B, K), Wf: (K, E)."""
    B, K = stats.shape
    K2, E = Wf.shape
    assert K == K2
    if tm is None:
        tm = _pick_tile(B, 256, 8)
    assert B % tm == 0

    return pl.pallas_call(
        _linear_bias_kernel,
        out_shape=jax.ShapeDtypeStruct((B, E), jnp.float32),
        grid=(B // tm,),
        in_specs=[
            pl.BlockSpec((tm, K), lambda i: (i, 0)),
            pl.BlockSpec((K, E), lambda i: (0, 0)),
            pl.BlockSpec((1, E), lambda i: (0, 0)),
        ],
        out_specs=pl.BlockSpec((tm, E), lambda i: (i, 0)),
        compiler_params=pltpu.CompilerParams(dimension_semantics=("parallel",)),
    )(stats, Wf, bf.reshape(1, E))


# ---------------------------------------------------------------------------
# Kernel 3: AMSMLoss head
# ---------------------------------------------------------------------------
def _make_amsm_kernel(s, m, tn, with_label):
    """s, m baked as compile-time constants; tn needed for the global class index."""

    def kernel(*refs):
        if with_label:
            x_ref, w_ref, label_ref, out_ref, wn_ref = refs
        else:
            x_ref, w_ref, out_ref, wn_ref = refs

        ci = pl.program_id(0)   # class-tile index (outer, "parallel")
        bi = pl.program_id(1)   # batch-tile index (inner, "arbitrary")

        # Normalize the current W tile ONCE per class tile; the W block index is
        # constant across the inner batch axis so the normalized tile is reused
        # from VMEM scratch for every batch tile.
        @pl.when(bi == 0)
        def _():
            wf = w_ref[...].astype(jnp.float32)
            inv_w = lax.rsqrt(
                jnp.maximum(jnp.sum(wf * wf, axis=-1, keepdims=True), 1e-24))
            wn_ref[...] = (wf * inv_w).astype(wn_ref.dtype)

        x = x_ref[...]
        xf = x.astype(jnp.float32)
        inv_x = lax.rsqrt(
            jnp.maximum(jnp.sum(xf * xf, axis=-1, keepdims=True), 1e-24))
        xn = (xf * inv_x).astype(x.dtype)   # MXU operand stays in input dtype

        # Contract on the last dim of BOTH operands -> no (F, C) transpose of W.
        logits = lax.dot_general(
            xn, wn_ref[...],
            dimension_numbers=(((1,), (1,)), ((), ())),
            preferred_element_type=jnp.float32)          # (tm, tn) f32 accumulate

        if with_label:
            label = label_ref[...]                        # (tm, 1) int32
            cls = lax.broadcasted_iota(jnp.int32, logits.shape, 1) + ci * tn
            one_hot = (cls == label).astype(jnp.float32)
            # logits*(1-oh) + (logits-m)*oh == logits - m*oh ; then scale by s
            logits = (logits - m * one_hot) * s

        out_ref[...] = logits.astype(out_ref.dtype)

    return kernel


def amsm_loss(x, W, label=None, s=30.0, m=0.4, tm=None, tn=None):
    """Pallas implementation of AMSMLoss.forward (logits / margin path)."""
    B, F = x.shape
    C, F2 = W.shape
    assert F == F2

    if tm is None:
        tm = _pick_tile(B, 256, 8)     # batch tile (sublane-aligned)
    if tn is None:
        tn = _pick_tile(C, 512, 128)   # class tile (lane-dense output)
    assert B % tm == 0 and C % tn == 0

    grid = (C // tn, B // tm)          # class tiles OUTER, batch tiles INNER
    with_label = label is not None
    kernel = _make_amsm_kernel(float(s), float(m), tn, with_label)

    in_specs = [
        pl.BlockSpec((tm, F), lambda ci, bi: (bi, 0)),   # x tile
        pl.BlockSpec((tn, F), lambda ci, bi: (ci, 0)),   # W tile (resident on inner axis)
    ]
    args = [x, W]
    if with_label:
        in_specs.append(pl.BlockSpec((tm, 1), lambda ci, bi: (bi, 0)))
        args.append(label.astype(jnp.int32).reshape(B, 1))

    # Rough VMEM budget: double-buffered x/W/out/label tiles + normalized-W scratch.
    est = 4 * (2 * (tm * F + tn * F + tm * tn + tm) + tn * F)
    vmem_limit = max(32 * 1024 * 1024, int(est * 5 // 4))
    vmem_limit = min(vmem_limit, 56 * 1024 * 1024)

    return pl.pallas_call(
        kernel,
        out_shape=jax.ShapeDtypeStruct((B, C), jnp.float32),
        grid_spec=pltpu.PrefetchScalarGridSpec(
            num_scalar_prefetch=0,
            grid=grid,
            in_specs=in_specs,
            out_specs=pl.BlockSpec((tm, tn), lambda ci, bi: (bi, ci)),
            scratch_shapes=[pltpu.VMEM((tn, F), W.dtype)],   # normalized W tile
        ),
        compiler_params=pltpu.CompilerParams(
            dimension_semantics=("parallel", "arbitrary"),
            vmem_limit_bytes=vmem_limit,
        ),
    )(*args)


# ---------------------------------------------------------------------------
# Head forward (ResNetV4b.forward from the backbone output onward)
# ---------------------------------------------------------------------------
def resnetv4b_head_forward(feat_map, params, label=None, s=30.0, m=0.4):
    # TODO(synk): PreResNetV3 backbone not ported; feat_map is its (B, C*freq, T) output.
    stats = astp_pool(feat_map, params["att_w1"], params["att_b1"],
                      params["att_w2"], params["att_b2"])
    Wf, bf = fold_speaker_embedding_params(params)
    emb = speaker_embedding(stats, Wf, bf)
    if label is None:
        return emb
    return amsm_loss(emb, params["cls_w"], label, s, m)


# ---------------------------------------------------------------------------
# Pure-JAX references
# ---------------------------------------------------------------------------
def _ref_astp(x, w1, b1, w2, b2):
    a = jnp.tanh(jnp.einsum("bdt,kd->bkt", x, w1) + b1[None, :, None])
    e = jnp.einsum("bkt,dk->bdt", a, w2) + b2[None, :, None]
    w = jax.nn.softmax(e, axis=2)
    mu = jnp.sum(x * w, axis=2)
    sg = jnp.sqrt(jnp.maximum(jnp.sum(x * x * w, axis=2) - mu * mu, 1e-5))
    return jnp.concatenate([mu, sg], axis=1)


def _ref_embedding(stats, p, eps=1e-5):
    xs = (stats - p["bn1_mean"]) / jnp.sqrt(p["bn1_var"] + eps) * p["bn1_gamma"] + p["bn1_beta"]
    y = xs @ p["fc_w"].T + p["fc_b"]
    return (y - p["bn2_mean"]) / jnp.sqrt(p["bn2_var"] + eps) * p["bn2_gamma"] + p["bn2_beta"]


def _ref_amsm(x, W, label, s, m):
    xn = x / jnp.maximum(jnp.linalg.norm(x, axis=-1, keepdims=True), 1e-12)
    wn = W / jnp.maximum(jnp.linalg.norm(W, axis=-1, keepdims=True), 1e-12)
    logits = xn @ wn.T
    if label is None:
        return logits
    one_hot = jax.nn.one_hot(label, W.shape[0], dtype=logits.dtype)
    return (logits - m * one_hot) * s


if __name__ == "__main__":
    key = jax.random.PRNGKey(0)
    # Small shapes consistent with the head: real model has D=2816, Bn=128, E=256, C=6000.
    B, D, T = 16, 256, 16          # batch, channels*freq of backbone output, frames
    Bn, E, C = 32, 128, 512        # ASTP bottleneck, embedding dim, num classes
    K = 2 * D                      # ASTP output dim
    s_val, m_val = 30.0, 0.4

    ks = jax.random.split(key, 18)
    feat_map = jax.random.normal(ks[0], (B, D, T), dtype=jnp.float32)

    params = {
        "att_w1": 0.05 * jax.random.normal(ks[1], (Bn, D), dtype=jnp.float32),
        "att_b1": 0.05 * jax.random.normal(ks[2], (Bn,), dtype=jnp.float32),
        "att_w2": 0.05 * jax.random.normal(ks[3], (D, Bn), dtype=jnp.float32),
        "att_b2": 0.05 * jax.random.normal(ks[4], (D,), dtype=jnp.float32),
        "fc_w": jax.random.normal(ks[5], (E, K), dtype=jnp.float32) / (K ** 0.5),
        "fc_b": 0.05 * jax.random.normal(ks[6], (E,), dtype=jnp.float32),
        "bn1_gamma": 1.0 + 0.1 * jax.random.normal(ks[7], (K,), dtype=jnp.float32),
        "bn1_beta": 0.1 * jax.random.normal(ks[8], (K,), dtype=jnp.float32),
        "bn1_mean": 0.1 * jax.random.normal(ks[9], (K,), dtype=jnp.float32),
        "bn1_var": 0.9 + 0.1 * jnp.abs(jax.random.normal(ks[10], (K,), dtype=jnp.float32)),
        "bn2_gamma": 1.0 + 0.1 * jax.random.normal(ks[11], (E,), dtype=jnp.float32),
        "bn2_beta": 0.1 * jax.random.normal(ks[12], (E,), dtype=jnp.float32),
        "bn2_mean": 0.1 * jax.random.normal(ks[13], (E,), dtype=jnp.float32),
        "bn2_var": 0.9 + 0.1 * jnp.abs(jax.random.normal(ks[14], (E,), dtype=jnp.float32)),
    }
    # xavier_uniform_ for the AMSM weight of shape (num_classes, embed_features)
    bound = (6.0 / (E + C)) ** 0.5
    params["cls_w"] = jax.random.uniform(ks[15], (C, E), dtype=jnp.float32,
                                         minval=-bound, maxval=bound)
    label = jax.random.randint(ks[16], (B,), 0, C, dtype=jnp.int32)

    # --- Pallas head, stage by stage (small tiles exercise the class x batch grid) ---
    stats = astp_pool(feat_map, params["att_w1"], params["att_b1"],
                      params["att_w2"], params["att_b2"])
    Wf, bf = fold_speaker_embedding_params(params)
    emb = speaker_embedding(stats, Wf, bf)
    logits = amsm_loss(emb, params["cls_w"], None, s_val, m_val, tm=8, tn=128)
    out = amsm_loss(emb, params["cls_w"], label, s_val, m_val, tm=8, tn=128)
    emb_path = resnetv4b_head_forward(feat_map, params, None, s_val, m_val)
    jax.block_until_ready((stats, emb, logits, out, emb_path))

    # --- references ---
    ref_stats = _ref_astp(feat_map, params["att_w1"], params["att_b1"],
                          params["att_w2"], params["att_b2"])
    ref_emb = _ref_embedding(ref_stats, params)
    ref_logits = _ref_amsm(ref_emb, params["cls_w"], None, s_val, m_val)
    ref_out = _ref_amsm(ref_emb, params["cls_w"], label, s_val, m_val)

    assert jnp.allclose(stats, ref_stats, atol=1e-4, rtol=1e-4), "ASTP mismatch"
    assert jnp.allclose(emb, ref_emb, atol=1e-3, rtol=1e-3), "embedding mismatch"
    assert jnp.allclose(emb_path, ref_emb, atol=1e-3, rtol=1e-3), "head (no-label) mismatch"
    assert jnp.allclose(logits, ref_logits, atol=1e-3, rtol=1e-3), "logits mismatch"
    assert jnp.allclose(out, ref_out, atol=5e-3, rtol=1e-3), "margin output mismatch"

    print("KERNEL_OK")
</pallas_src>

<mosaic_0001>
module attributes {stable_mosaic.version = 11 : i64} {
  func.func @_astp_kernel(%arg0: i32, %arg1: memref<1x16x256xf32, #tpu.memory_space<vmem>>, %arg2: memref<256x32xf32, #tpu.memory_space<vmem>>, %arg3: memref<1x32xf32, #tpu.memory_space<vmem>>, %arg4: memref<32x256xf32, #tpu.memory_space<vmem>>, %arg5: memref<1x256xf32, #tpu.memory_space<vmem>>, %arg6: memref<1x2x256xf32, #tpu.memory_space<vmem>>) attributes {dimension_semantics = [#tpu.dimension_semantics<parallel>], iteration_bounds = array<i64: 16>, scalar_prefetch = 0 : i64, scratch_operands = 0 : i64, tpu.core_type = #tpu.core_type<tc>, window_params = [{transform_indices = @transform_0, window_bounds = array<i64: 1, 16, 256>}, {pipeline_mode = #tpu.pipeline_mode<synchronous>, transform_indices = @transform_1, window_bounds = array<i64: 256, 32>}, {pipeline_mode = #tpu.pipeline_mode<synchronous>, transform_indices = @transform_2, window_bounds = array<i64: 1, 32>}, {pipeline_mode = #tpu.pipeline_mode<synchronous>, transform_indices = @transform_3, window_bounds = array<i64: 32, 256>}, {pipeline_mode = #tpu.pipeline_mode<synchronous>, transform_indices = @transform_4, window_bounds = array<i64: 1, 256>}, {transform_indices = @transform_5, window_bounds = array<i64: 1, 2, 256>}]} {
    %c0 = arith.constant 0 : index
    %c0_0 = arith.constant 0 : index
    %c0_1 = arith.constant 0 : index
    %0 = vector.load %arg1[%c0, %c0_0, %c0_1] : memref<1x16x256xf32, #tpu.memory_space<vmem>>, vector<1x16x256xf32>
    %1 = vector.shape_cast %0 : vector<1x16x256xf32> to vector<16x256xf32>
    %c0_2 = arith.constant 0 : index
    %c0_3 = arith.constant 0 : index
    %2 = vector.load %arg2[%c0_2, %c0_3] : memref<256x32xf32, #tpu.memory_space<vmem>>, vector<256x32xf32>
    %cst = arith.constant dense<0.000000e+00> : vector<16x32xf32>
    %3 = tpu.matmul %1, %2, %cst {dimension_numbers = #tpu.dot_dimension_numbers<[1], [0], [0], [1], [0, 0, 1, 1], [], []>} : vector<16x256xf32>, vector<256x32xf32>, vector<16x32xf32> -> vector<16x32xf32>
    %c0_4 = arith.constant 0 : index
    %c0_5 = arith.constant 0 : index
    %4 = vector.load %arg3[%c0_4, %c0_5] : memref<1x32xf32, #tpu.memory_space<vmem>>, vector<1x32xf32>
    %5 = vector.broadcast %4 : vector<1x32xf32> to vector<16x32xf32>
    %6 = arith.addf %3, %5 : vector<16x32xf32>
    %7 = math.tanh %6 : vector<16x32xf32>
    %c0_6 = arith.constant 0 : index
    %c0_7 = arith.constant 0 : index
    %8 = vector.load %arg4[%c0_6, %c0_7] : memref<32x256xf32, #tpu.memory_space<vmem>>, vector<32x256xf32>
    %cst_8 = arith.constant dense<0.000000e+00> : vector<16x256xf32>
    %9 = tpu.matmul %7, %8, %cst_8 {dimension_numbers = #tpu.dot_dimension_numbers<[1], [0], [0], [1], [0, 0, 1, 1], [], []>} : vector<16x32xf32>, vector<32x256xf32>, vector<16x256xf32> -> vector<16x256xf32>
    %c0_9 = arith.constant 0 : index
    %c0_10 = arith.constant 0 : index
    %10 = vector.load %arg5[%c0_9, %c0_10] : memref<1x256xf32, #tpu.memory_space<vmem>>, vector<1x256xf32>
    %11 = vector.broadcast %10 : vector<1x256xf32> to vector<16x256xf32>
    %12 = arith.addf %9, %11 : vector<16x256xf32>
    %cst_11 = arith.constant dense<0xFF800000> : vector<256xf32>
    %13 = vector.multi_reduction <maximumf>, %12, %cst_11 [0] : vector<16x256xf32> to vector<256xf32>
    %14 = vector.shape_cast %13 : vector<256xf32> to vector<1x256xf32>
    %15 = vector.broadcast %14 : vector<1x256xf32> to vector<16x256xf32>
    %16 = arith.subf %12, %15 : vector<16x256xf32>
    %17 = math.exp %16 : vector<16x256xf32>
    %cst_12 = arith.constant dense<0.000000e+00> : vector<256xf32>
    %18 = vector.multi_reduction <add>, %17, %cst_12 [0] : vector<16x256xf32> to vector<256xf32>
    %19 = vector.shape_cast %18 : vector<256xf32> to vector<1x256xf32>
    %20 = vector.broadcast %19 : vector<1x256xf32> to vector<16x256xf32>
    %21 = arith.divf %17, %20 : vector<16x256xf32>
    %22 = arith.mulf %1, %21 : vector<16x256xf32>
    %cst_13 = arith.constant dense<0.000000e+00> : vector<256xf32>
    %23 = vector.multi_reduction <add>, %22, %cst_13 [0] : vector<16x256xf32> to vector<256xf32>
    %24 = vector.shape_cast %23 : vector<256xf32> to vector<1x256xf32>
    %25 = arith.mulf %1, %1 : vector<16x256xf32>
    %26 = arith.mulf %25, %21 : vector<16x256xf32>
    %cst_14 = arith.constant dense<0.000000e+00> : vector<256xf32>
    %27 = vector.multi_reduction <add>, %26, %cst_14 [0] : vector<16x256xf32> to vector<256xf32>
    %28 = vector.shape_cast %27 : vector<256xf32> to vector<1x256xf32>
    %29 = arith.mulf %24, %24 : vector<1x256xf32>
    %30 = arith.subf %28, %29 : vector<1x256xf32>
    %cst_15 = arith.constant 9.99999974E-6 : f32
    %31 = vector.broadcast %cst_15 : f32 to vector<1x256xf32>
    %32 = arith.maximumf %30, %31 : vector<1x256xf32>
    %33 = math.sqrt %32 : vector<1x256xf32>
    %34 = tpu.concatenate %24, %33 in 0 : vector<1x256xf32>, vector<1x256xf32> -> vector<2x256xf32>
    %c0_16 = arith.constant 0 : index
    %c0_17 = arith.constant 0 : index
    %c0_18 = arith.constant 0 : index
    %35 = vector.load %arg6[%c0_16, %c0_17, %c0_18] : memref<1x2x256xf32, #tpu.memory_space<vmem>>, vector<1x2x256xf32>
    %36 = vector.shape_cast %35 : vector<1x2x256xf32> to vector<2x256xf32>
    %37 = vector.shape_cast %34 : vector<2x256xf32> to vector<1x2x256xf32>
    tpu.vector_store %arg6[%c0_16, %c0_17, %c0_18], %37 {strides = array<i32>} : memref<1x2x256xf32, #tpu.memory_space<vmem>>, vector<1x2x256xf32>,
    return
  }
  func.func @transform_0(%arg0: i32) -> (i32, i32, i32) {
    %c0_i32 = arith.constant 0 : i32
    %c0_i32_0 = arith.constant 0 : i32
    %c0_i32_1 = arith.constant 0 : i32
    return %arg0, %c0_i32, %c0_i32_0 : i32, i32, i32
  }
  func.func @transform_1(%arg0: i32) -> (i32, i32) {
    %c0_i32 = arith.constant 0 : i32
    %c0_i32_0 = arith.constant 0 : i32
    %c0_i32_1 = arith.constant 0 : i32
    return %c0_i32, %c0_i32_0 : i32, i32
  }
  func.func @transform_2(%arg0: i32) -> (i32, i32) {
    %c0_i32 = arith.constant 0 : i32
    %c0_i32_0 = arith.constant 0 : i32
    %c0_i32_1 = arith.constant 0 : i32
    return %c0_i32, %c0_i32_0 : i32, i32
  }
  func.func @transform_3(%arg0: i32) -> (i32, i32) {
    %c0_i32 = arith.constant 0 : i32
    %c0_i32_0 = arith.constant 0 : i32
    %c0_i32_1 = arith.constant 0 : i32
    return %c0_i32, %c0_i32_0 : i32, i32
  }
  func.func @transform_4(%arg0: i32) -> (i32, i32) {
    %c0_i32 = arith.constant 0 : i32
    %c0_i32_0 = arith.constant 0 : i32
    %c0_i32_1 = arith.constant 0 : i32
    return %c0_i32, %c0_i32_0 : i32, i32
  }
  func.func @transform_5(%arg0: i32) -> (i32, i32, i32) {
    %c0_i32 = arith.constant 0 : i32
    %c0_i32_0 = arith.constant 0 : i32
    %c0_i32_1 = arith.constant 0 : i32
    return %arg0, %c0_i32, %c0_i32_0 : i32, i32, i32
  }
}

</mosaic_0001>

<llo_original>
// kernel: tpu_custom_call.1
$region0: #{tpu_custom_call.1}
  #allocation0 [shape = 'u32[]', space=smem, size = 0x4, offset = 0x4, fixed_abs, tag = 'smem constant byte address 0x4 - core index']
  #allocation1 [shape = 'u32[144,128]{1,0:T(1,128)}', space=vmem, size = 0x12000, scoped, tag = 'internal scratch']
  %s0 = inlined_call_operand.hbm [shape: f32[16,16,256], index: 0, kind: input, shape index: {}]
  %s1 = inlined_call_operand.vmem [shape: f32[256,32], index: 1, kind: input, shape index: {}]
  %s2 = inlined_call_operand.vmem [shape: f32[1,32], index: 2, kind: input, shape index: {}]
  %s3 = inlined_call_operand.vmem [shape: f32[32,256], index: 3, kind: input, shape index: {}]
  %s4 = inlined_call_operand.vmem [shape: f32[1,256], index: 4, kind: input, shape index: {}]
  %s5 = inlined_call_operand.hbm [shape: f32[16,2,256], index: 5, kind: output, shape index: {}]
  %s6 = sld [smem:[#allocation0]]
  $region57: #{tpu_custom_call.1} parent=0
    _
  %s8 = ssub.s32 1, %s6
  %s9 = scalar_select 0, %s8, %s6
  $region1: #{tpu_custom_call.1} parent=0
    #allocation2 [shape = 'u8[32768]{0}', space=vmem, size = 0x8000, scoped, tag = 'input window, operand 0']
    #allocation3 [shape = 's32[2]{0}', space=sflag, size = 0x8, scoped, tag = 'scoped memory for tpu_custom_call.1']
    #allocation4 [shape = 's32[2]{0}', space=sflag, size = 0x8, scoped, tag = 'scoped memory for tpu_custom_call.1']
    #allocation5 [shape = 'u8[4096]{0}', space=vmem, size = 0x1000, scoped, tag = 'output window, operand 0']
    %10 = vsyncpa [#allocation3], 0
    %s11 = scalar_lea.sflag [#allocation3], 1
    %12 = vsyncpa %s11, 0
    %13 = vsyncpa [#allocation4], 0
    %s14 = scalar_lea.sflag [#allocation4], 1
    %15 = vsyncpa %s14, 0
    loop: start=0, step=1, limit=18
    $region2: #{tpu_custom_call.1} parent=1 // loop_pre_header
      _
    $region3: #{tpu_custom_call.1} parent=1 // loop_header
      %s17 = sphi 0, %s21
      %p18 = scmp.ge.s32.totalorder %s17, 18
      %s27 = sphi 0, %s29
      %s30 = sphi 0, %s27
      %s31 = sphi 0, %s30
      %s47 = sphi 0, %s31
      %s51 = sphi 0, %s51
      %s53 = sphi 0, %s51
      %s54 = sphi 0, %s53
      %s68 = sphi 0, %s54
      %s72 = sphi 0, %s72
      %s74 = sphi 0, %s72
      %s75 = sphi 0, %s74
      %s89 = sphi 0, %s75
      %s93 = sphi 0, %s93
      %s95 = sphi 0, %s93
      %s96 = sphi 0, %s95
      %s110 = sphi 0, %s96
      %s114 = sphi 0, %s114
      %s116 = sphi 0, %s114
      %s117 = sphi 0, %s116
      %s131 = sphi 0, %s117
      %s137 = sphi 0, %s139
      %s140 = sphi 0, %s137
      %s141 = sphi 0, %s140
      %s157 = sphi 0, %s141
    $region4: #{tpu_custom_call.1} parent=1 // loop_header_branch
      %20 = sbr.rel (%p18) target = $region8
    $region5: #{tpu_custom_call.1} parent=1 // loop_body
      %s22 = ssub.s32 %s17, 1
      %s23 = ssub.s32 %s17, 2
      %s24 = sadd.s32 %s17, 1
      %s25 = ssub.s32 %s17, %s24
      %p26 = scmp.eq.s32.totalorder %s25, 0
      %s28 = sadd.s32 %s27, 1
      %s29 = scalar_select %p26, %s27, %s28
      %p32 = pneg %p26
      %p33 = scmp.eq.s32.totalorder %s17, 15
      %p34 = por %p32, %p33
      %p35 = scmp.ne.s32.totalorder %s27, %s30
      %p36 = scmp.eq.s32.totalorder %s17, 0
      %p37 = por %p35, %p36
      %p38 = scmp.ne.s32.totalorder %s27, %s30
      %p39 = scmp.eq.s32.totalorder %s22, 15
      %p40 = por %p38, %p39
      %p41 = scmp.ne.s32.totalorder %s30, %s31
      %p42 = scmp.eq.s32.totalorder %s22, 0
      %p43 = por %p41, %p42
      %p44 = scmp.ne.s32.totalorder %s30, %s31
      %p45 = scmp.eq.s32.totalorder %s23, 15
      %p46 = por %p44, %p45
      %p48 = scmp.ne.s32.totalorder %s31, %s47
      %p49 = scmp.eq.s32.totalorder %s23, 0
      %p50 = por %p48, %p49
      %s52 = sadd.s32 %s51, 1
      %p55 = scmp.eq.s32.totalorder %s17, 15
      %p56 = scmp.ne.s32.totalorder %s51, %s53
      %p57 = scmp.eq.s32.totalorder %s17, 0
      %p58 = por %p56, %p57
      %p59 = scmp.ne.s32.totalorder %s51, %s53
      %p60 = scmp.eq.s32.totalorder %s22, 15
      %p61 = por %p59, %p60
      %p62 = scmp.ne.s32.totalorder %s53, %s54
      %p63 = scmp.eq.s32.totalorder %s22, 0
      %p64 = por %p62, %p63
      %p65 = scmp.ne.s32.totalorder %s53, %s54
      %p66 = scmp.eq.s32.totalorder %s23, 15
      %p67 = por %p65, %p66
      %p69 = scmp.ne.s32.totalorder %s54, %s68
      %p70 = scmp.eq.s32.totalorder %s23, 0
      %p71 = por %p69, %p70
      %s73 = sadd.s32 %s72, 1
      %p76 = scmp.eq.s32.totalorder %s17, 15
      %p77 = scmp.ne.s32.totalorder %s72, %s74
      %p78 = scmp.eq.s32.totalorder %s17, 0
      %p79 = por %p77, %p78
      %p80 = scmp.ne.s32.totalorder %s72, %s74
      %p81 = scmp.eq.s32.totalorder %s22, 15
      %p82 = por %p80, %p81
      %p83 = scmp.ne.s32.totalorder %s74, %s75
      %p84 = scmp.eq.s32.totalorder %s22, 0
      %p85 = por %p83, %p84
      %p86 = scmp.ne.s32.totalorder %s74, %s75
      %p87 = scmp.eq.s32.totalorder %s23, 15
      %p88 = por %p86, %p87
      %p90 = scmp.ne.s32.totalorder %s75, %s89
      %p91 = scmp.eq.s32.totalorder %s23, 0
      %p92 = por %p90, %p91
      %s94 = sadd.s32 %s93, 1
      %p97 = scmp.eq.s32.totalorder %s17, 15
      %p98 = scmp.ne.s32.totalorder %s93, %s95
      %p99 = scmp.eq.s32.totalorder %s17, 0
      %p100 = por %p98, %p99
      %p101 = scmp.ne.s32.totalorder %s93, %s95
      %p102 = scmp.eq.s32.totalorder %s22, 15
      %p103 = por %p101, %p102
      %p104 = scmp.ne.s32.totalorder %s95, %s96
      %p105 = scmp.eq.s32.totalorder %s22, 0
      %p106 = por %p104, %p105
      %p107 = scmp.ne.s32.totalorder %s95, %s96
      %p108 = scmp.eq.s32.totalorder %s23, 15
      %p109 = por %p107, %p108
      %p111 = scmp.ne.s32.totalorder %s96, %s110
      %p112 = scmp.eq.s32.totalorder %s23, 0
      %p113 = por %p111, %p112
      %s115 = sadd.s32 %s114, 1
      %p118 = scmp.eq.s32.totalorder %s17, 15
      %p119 = scmp.ne.s32.totalorder %s114, %s116
      %p120 = scmp.eq.s32.totalorder %s17, 0
      %p121 = por %p119, %p120
      %p122 = scmp.ne.s32.totalorder %s114, %s116
      %p123 = scmp.eq.s32.totalorder %s22, 15
      %p124 = por %p122, %p123
      %p125 = scmp.ne.s32.totalorder %s116, %s117
      %p126 = scmp.eq.s32.totalorder %s22, 0
      %p127 = por %p125, %p126
      %p128 = scmp.ne.s32.totalorder %s116, %s117
      %p129 = scmp.eq.s32.totalorder %s23, 15
      %p130 = por %p128, %p129
      %p132 = scmp.ne.s32.totalorder %s117, %s131
      %p133 = scmp.eq.s32.totalorder %s23, 0
      %p134 = por %p132, %p133
      %s135 = ssub.s32 %s17, %s24
      %p136 = scmp.eq.s32.totalorder %s135, 0
      %s138 = sadd.s32 %s137, 1
      %s139 = scalar_select %p136, %s137, %s138
      %p142 = pneg %p136
      %p143 = scmp.eq.s32.totalorder %s17, 15
      %p144 = por %p142, %p143
      %p145 = scmp.ne.s32.totalorder %s137, %s140
      %p146 = scmp.eq.s32.totalorder %s17, 0
      %p147 = por %p145, %p146
      %p148 = scmp.ne.s32.totalorder %s137, %s140
      %p149 = scmp.eq.s32.totalorder %s22, 15
      %p150 = por %p148, %p149
      %p151 = scmp.ne.s32.totalorder %s140, %s141
      %p152 = scmp.eq.s32.totalorder %s22, 0
      %p153 = por %p151, %p152
      %p154 = scmp.ne.s32.totalorder %s140, %s141
      %p155 = scmp.eq.s32.totalorder %s23, 15
      %p156 = por %p154, %p155
      %p158 = scmp.ne.s32.totalorder %s141, %s157
      %p159 = scmp.eq.s32.totalorder %s23, 0
      %p160 = por %p158, %p159
      %p161 = scmp.le.s32.totalorder 1, %s17
      %p162 = scmp.lt.s32.totalorder %s17, 17
      %p163 = pnand %p161, %p162
      %p164 = pneg %p163
      // Predicated region
      $region9: #{tpu_custom_call.1} parent=5 // pred_check
        _
      $region10: #{tpu_custom_call.1} parent=5 // pred_check_branch
        %166 = sbr.rel (%p163) target = $region12
      $region11: #{tpu_custom_call.1} parent=5 // pred_region
        %s167 = ssub.s32 %s17, 1
        // Predicated region
        $region13: #{tpu_custom_call.1} parent=11 // pred_check
          %p168 = pneg %p64
        $region14: #{tpu_custom_call.1} parent=11 // pred_check_branch
          %170 = sbr.rel (%p168) target = $region16
        $region15: #{tpu_custom_call.1} parent=11 // pred_region
          _
        $region16: #{tpu_custom_call.1} parent=11 // pred_fallthru
          _
        // Predicated region
        $region17: #{tpu_custom_call.1} parent=11 // pred_check
          %p171 = pneg %p85
        $region18: #{tpu_custom_call.1} parent=11 // pred_check_branch
          %173 = sbr.rel (%p171) target = $region20
        $region19: #{tpu_custom_call.1} parent=11 // pred_region
          _
        $region20: #{tpu_custom_call.1} parent=11 // pred_fallthru
          _
        // Predicated region
        $region21: #{tpu_custom_call.1} parent=11 // pred_check
          %p174 = pneg %p106
        $region22: #{tpu_custom_call.1} parent=11 // pred_check_branch
          %176 = sbr.rel (%p174) target = $region24
        $region23: #{tpu_custom_call.1} parent=11 // pred_region
          _
        $region24: #{tpu_custom_call.1} parent=11 // pred_fallthru
          _
        // Predicated region
        $region25: #{tpu_custom_call.1} parent=11 // pred_check
          %p177 = pneg %p127
        $region26: #{tpu_custom_call.1} parent=11 // pred_check_branch
          %179 = sbr.rel (%p177) target = $region28
        $region27: #{tpu_custom_call.1} parent=11 // pred_region
          _
        $region28: #{tpu_custom_call.1} parent=11 // pred_fallthru
          _
      $region12: #{tpu_custom_call.1} parent=5 // pred_fallthru
        _
      %p180 = scmp.lt.s32.totalorder %s17, 16
      // Predicated region
      $region29: #{tpu_custom_call.1} parent=5 // pred_check
        %p181 = pneg %p180
      $region30: #{tpu_custom_call.1} parent=5 // pred_check_branch
        %183 = sbr.rel (%p181) target = $region32
      $region31: #{tpu_custom_call.1} parent=5 // pred_region
        // Predicated region
        $region33: #{tpu_custom_call.1} parent=31 // pred_check
          %p184 = pneg %p37
        $region34: #{tpu_custom_call.1} parent=31 // pred_check_branch
          %186 = sbr.rel (%p184) target = $region36
        $region35: #{tpu_custom_call.1} parent=31 // pred_region
          %s187 = sand.u32 %s27, 1
          %s188 = scalar_lea.sflag [#allocation3], %s187
          %s189 = sand.u32 %s27, 1
          %s190 = smul.addr %s189, 32
          %s191 = scalar_lea.vmem [#allocation2], %s190
          %s193 = ssub.s32 512, 512
          %194 = vsyncadd %s188, %s193
          %s195 = smul.addr %s17, 4
          %s196 = smul.addr %s195, 128
          %s197 = scalar_lea.hbm %s0, %s196
          %s198 = sshll.u32 %s191, 4
          %s199 = int_to_ptr.vmem [resolvable:$true] %s198
          %204 = dma.hbm_to_vmem [thread:$0]  %s197, 512, %s199, %s188, 256, 256, 16
        $region36: #{tpu_custom_call.1} parent=31 // pred_fallthru
          _
      $region32: #{tpu_custom_call.1} parent=5 // pred_fallthru
        _
      %p205 = scmp.le.s32.totalorder 1, %s17
      %p206 = scmp.lt.s32.totalorder %s17, 17
      %p207 = pnand %p205, %p206
      %p208 = pneg %p207
      // Predicated region
      $region37: #{tpu_custom_call.1} parent=5 // pred_check
        _
      $region38: #{tpu_custom_call.1} parent=5 // pred_check_branch
        %210 = sbr.rel (%p207) target = $region40
      $region39: #{tpu_custom_call.1} parent=5 // pred_region
        %s211 = ssub.s32 %s17, 1
        %s212 = sand.u32 %s30, 1
        %s213 = scalar_lea.sflag [#allocation3], %s212
        %s214 = sand.u32 %s30, 1
        %s215 = smul.addr %s214, 32
        %s216 = scalar_lea.vmem [#allocation2], %s215
        // Predicated region
        $region41: #{tpu_custom_call.1} parent=39 // pred_check
          %p217 = pneg %p43
        $region42: #{tpu_custom_call.1} parent=39 // pred_check_branch
          %219 = sbr.rel (%p217) target = $region44
        $region43: #{tpu_custom_call.1} parent=39 // pred_region
          %220 = dma.done %s213, 512
        $region44: #{tpu_custom_call.1} parent=39 // pred_fallthru
          _
        %s221 = sand.u32 %s30, 1
        %s222 = scalar_lea.sflag [#allocation3], %s221
        %s223 = sand.u32 %s30, 1
        %s224 = smul.addr %s223, 32
        %s225 = scalar_lea.vmem [#allocation2], %s224
        %p226 = pneg %p43
        %p227 = pneg %p40
        %p228 = pneg %p64
        %p229 = pneg %p61
        %p230 = pneg %p85
        %p231 = pneg %p82
        %p232 = pneg %p106
        %p233 = pneg %p103
        %p234 = pneg %p127
        %p235 = pneg %p124
        %p236 = pneg %p153
        %p237 = pneg %p150
        %s238 = sand.u32 %s140, 1
        %s239 = scalar_lea.sflag [#allocation4], %s238
        %s240 = sand.u32 %s140, 1
        %s241 = smul.addr %s240, 4
        %s242 = scalar_lea.vmem [#allocation5], %s241
        %v243 = vld [vmem:[%s216] sm:$0xff]
        %v244 = vld [vmem:[%s216 + $0x8] sm:$0xff]
        %v245 = vld [vmem:[%s216 + $0x10] sm:$0xff]
        %v246 = vld [vmem:[%s216 + $0x18] sm:$0xff]
        %v247 = vld [vmem:[%s1] sm:$0xff]
        %v248 = vld [vmem:[%s1 + $0x8] sm:$0xff]
        %v249 = vld [vmem:[%s1 + $0x10] sm:$0xff]
        %v250 = vld [vmem:[%s1 + $0x18] sm:$0xff]
        %v251 = vld [vmem:[%s1 + $0x20] sm:$0xff]
        %v252 = vld [vmem:[%s1 + $0x28] sm:$0xff]
        %v253 = vld [vmem:[%s1 + $0x30] sm:$0xff]
        %v254 = vld [vmem:[%s1 + $0x38] sm:$0xff]
        %v255 = vld [vmem:[%s1 + $0x40] sm:$0xff]
        %v256 = vld [vmem:[%s1 + $0x48] sm:$0xff]
        %v257 = vld [vmem:[%s1 + $0x50] sm:$0xff]
        %v258 = vld [vmem:[%s1 + $0x58] sm:$0xff]
        %v259 = vld [vmem:[%s1 + $0x60] sm:$0xff]
        %v260 = vld [vmem:[%s1 + $0x68] sm:$0xff]
        %v261 = vld [vmem:[%s1 + $0x70] sm:$0xff]
        %v262 = vld [vmem:[%s1 + $0x78] sm:$0xff]
        %v263 = vld [vmem:[%s1 + $0x80] sm:$0xff]
        %v264 = vld [vmem:[%s1 + $0x88] sm:$0xff]
        %v265 = vld [vmem:[%s1 + $0x90] sm:$0xff]
        %v266 = vld [vmem:[%s1 + $0x98] sm:$0xff]
        %v267 = vld [vmem:[%s1 + $0xa0] sm:$0xff]
        %v268 = vld [vmem:[%s1 + $0xa8] sm:$0xff]
        %v269 = vld [vmem:[%s1 + $0xb0] sm:$0xff]
        %v270 = vld [vmem:[%s1 + $0xb8] sm:$0xff]
        %v271 = vld [vmem:[%s1 + $0xc0] sm:$0xff]
        %v272 = vld [vmem:[%s1 + $0xc8] sm:$0xff]
        %v273 = vld [vmem:[%s1 + $0xd0] sm:$0xff]
        %v274 = vld [vmem:[%s1 + $0xd8] sm:$0xff]
        %v275 = vld [vmem:[%s1 + $0xe0] sm:$0xff]
        %v276 = vld [vmem:[%s1 + $0xe8] sm:$0xff]
        %v277 = vld [vmem:[%s1 + $0xf0] sm:$0xff]
        %v278 = vld [vmem:[%s1 + $0xf8] sm:$0xff]
        %v279 = vld [vmem:[%s2] sm:$0x1]
        %v281 = vlaneseq
        %v282 = vshrl.u32 %v281, 7
        %v283 = vsub.s32 0, %v282
        %v284 = vrot.slane %v279, %v283
        %286 = vmatprep.subr.mxu0 0.0
        %287 = vmatpush1.msra.mxu0 %v247
        %288 = vmatprep.subr.mxu0 0.0
        %289 = vmatpush1.msra.mxu0 %v248
        %290 = vmatprep.subr.mxu0 0.0
        %291 = vmatpush1.msra.mxu0 %v249
        %292 = vmatprep.subr.mxu0 0.0
        %293 = vmatpush1.msra.mxu0 %v250
        %294 = vmatprep.subr.mxu0 0.0
        %295 = vmatpush1.msra.mxu0 %v251
        %296 = vmatprep.subr.mxu0 0.0
        %297 = vmatpush1.msra.mxu0 %v252
        %298 = vmatprep.subr.mxu0 0.0
        %299 = vmatpush1.msra.mxu0 %v253
        %300 = vmatprep.subr.mxu0 0.0
        %301 = vmatpush1.msra.mxu0 %v254
        %302 = vmatprep.subr.mxu0 0.0
        %303 = vmatpush1.msra.mxu0 %v255
        %304 = vmatprep.subr.mxu0 0.0
        %305 = vmatpush1.msra.mxu0 %v256
        %306 = vmatprep.subr.mxu0 0.0
        %307 = vmatpush1.msra.mxu0 %v257
        %308 = vmatprep.subr.mxu0 0.0
        %309 = vmatpush1.msra.mxu0 %v258
        %310 = vmatprep.subr.mxu0 0.0
        %311 = vmatpush1.msra.mxu0 %v259
        %312 = vmatprep.subr.mxu0 0.0
        %313 = vmatpush1.msra.mxu0 %v260
        %314 = vmatprep.subr.mxu0 0.0
        %315 = vmatpush1.msra.mxu0 %v261
        %316 = vmatprep.subr.mxu0 0.0
        %317 = vmatpush1.msra.mxu0 %v262
        %318 = vmatprep.subr.mxu0 0.0
        %319 = vmatpush1.msra.mxu0 %v263
        %320 = vmatprep.subr.mxu0 0.0
        %321 = vmatpush1.msra.mxu0 %v264
        %322 = vmatprep.subr.mxu0 0.0
        %323 = vmatpush1.msra.mxu0 %v265
        %324 = vmatprep.subr.mxu0 0.0
        %325 = vmatpush1.msra.mxu0 %v266
        %326 = vmatprep.subr.mxu0 0.0
        %327 = vmatpush1.msra.mxu0 %v267
        %328 = vmatprep.subr.mxu0 0.0
        %329 = vmatpush1.msra.mxu0 %v268
        %330 = vmatprep.subr.mxu0 0.0
        %331 = vmatpush1.msra.mxu0 %v269
        %332 = vmatprep.subr.mxu0 0.0
        %333 = vmatpush1.msra.mxu0 %v270
        %334 = vmatprep.subr.mxu0 0.0
        %335 = vmatpush1.msra.mxu0 %v271
        %336 = vmatprep.subr.mxu0 0.0
        %337 = vmatpush1.msra.mxu0 %v272
        %338 = vmatprep.subr.mxu0 0.0
        %339 = vmatpush1.msra.mxu0 %v273
        %340 = vmatprep.subr.mxu0 0.0
        %341 = vmatpush1.msra.mxu0 %v274
        %342 = vmatprep.subr.mxu0 0.0
        %343 = vmatpush1.msra.mxu0 %v275
        %344 = vmatprep.subr.mxu0 0.0
        %345 = vmatpush1.msra.mxu0 %v276
        %346 = vmatprep.subr.mxu0 0.0
        %347 = vmatpush1.msra.mxu0 %v277
        %348 = vmatprep.subr.mxu0 0.0
        %349 = vmatpush1.msra.mxu0 %v278
        %350 = vmatprep.mubr.f32.mxu0 %v244
        %351 = vmatmul.mubr.f32.gmra.mrb[0].mxu0 %v243
        %v352 = vpop.f32.mrb[0].mxu0
        %v353 = vadd.f32 %v284, %v352
        %v354 = vpop.f32.mrb[0].mxu0
        %355 = vmatprep.mubr.f32.mxu0 %v246
        %356 = vmatmul.mubr.f32.gmra.mrb[0].mxu0 %v245
        %v357 = vpop.f32.mrb[0].mxu0
        %v358 = vadd.f32 %v284, %v357
        %v359 = vpop.f32.mrb[0].mxu0
        %360 = vdwg.mxu0
        %v361 = vtanh.pop %v353
        %v362 = vtanh.pop %v358
        %v363 = vld [vmem:[%s3] sm:$0xff]
        %v364 = vld [vmem:[%s3 + $0x8] sm:$0xff]
        %v365 = vld [vmem:[%s3 + $0x10] sm:$0xff]
        %v366 = vld [vmem:[%s3 + $0x18] sm:$0xff]
        %v367 = vld [vmem:[%s3 + $0x20] sm:$0xff]
        %v368 = vld [vmem:[%s3 + $0x28] sm:$0xff]
        %v369 = vld [vmem:[%s3 + $0x30] sm:$0xff]
        %v370 = vld [vmem:[%s3 + $0x38] sm:$0xff]
        %v371 = vld [vmem:[%s4] sm:$0x3]
        %v373 = vlaneseq
        %v374 = vshrl.u32 %v373, 7
        %v375 = vsub.s32 0, %v374
        %v376 = vrot.slane %v371, %v375
        %v377 = vlaneseq
        %v378 = vshrl.u32 %v377, 7
        %v379 = vsub.s32 1, %v378
        %v380 = vrot.slane %v371, %v379
        %vm383 = vcmask 261120
        %v385 = vsel %vm383, %v361, 0
        %v388 = vsel %vm383, %v362, 0
        %390 = vmatprep.subr.mxu0 %v364
        %391 = vmatpush1.msra.mxu0 %v363
        %392 = vmatprep.subr.mxu0 %v366
        %393 = vmatpush1.msra.mxu0 %v365
        %394 = vmatprep.subr.mxu0 %v368
        %395 = vmatpush1.msra.mxu0 %v367
        %396 = vmatprep.subr.mxu0 %v370
        %397 = vmatpush1.msra.mxu0 %v369
        %398 = vmatprep.subr.mxu0 0.0
        %399 = vmatpush1.msra.mxu0 0.0
        %400 = vmatprep.subr.mxu0 0.0
        %401 = vmatpush1.msra.mxu0 0.0
        %402 = vmatprep.subr.mxu0 0.0
        %403 = vmatpush1.msra.mxu0 0.0
        %404 = vmatprep.subr.mxu0 0.0
        %405 = vmatpush1.msra.mxu0 0.0
        %406 = vmatprep.subr.mxu0 0.0
        %407 = vmatpush1.msra.mxu0 0.0
        %408 = vmatprep.subr.mxu0 0.0
        %409 = vmatpush1.msra.mxu0 0.0
        %410 = vmatprep.subr.mxu0 0.0
        %411 = vmatpush1.msra.mxu0 0.0
        %412 = vmatprep.subr.mxu0 0.0
        %413 = vmatpush1.msra.mxu0 0.0
        %414 = vmatprep.subr.mxu0 0.0
        %415 = vmatpush1.msra.mxu0 0.0
        %416 = vmatprep.subr.mxu0 0.0
        %417 = vmatpush1.msra.mxu0 0.0
        %418 = vmatprep.subr.mxu0 0.0
        %419 = vmatpush1.msra.mxu0 0.0
        %420 = vmatprep.subr.mxu0 0.0
        %421 = vmatpush1.msra.mxu0 0.0
        %422 = vmatprep.subr.mxu0 0.0
        %423 = vmatpush1.msra.mxu0 0.0
        %424 = vmatprep.subr.mxu0 0.0
        %425 = vmatpush1.msra.mxu0 0.0
        %426 = vmatprep.subr.mxu0 0.0
        %427 = vmatpush1.msra.mxu0 0.0
        %428 = vmatprep.subr.mxu0 0.0
        %429 = vmatpush1.msra.mxu0 0.0
        %430 = vmatprep.subr.mxu0 0.0
        %431 = vmatpush1.msra.mxu0 0.0
        %432 = vmatprep.subr.mxu0 0.0
        %433 = vmatpush1.msra.mxu0 0.0
        %434 = vmatprep.subr.mxu0 0.0
        %435 = vmatpush1.msra.mxu0 0.0
        %436 = vmatprep.subr.mxu0 0.0
        %437 = vmatpush1.msra.mxu0 0.0
        %438 = vmatprep.subr.mxu0 0.0
        %439 = vmatpush1.msra.mxu0 0.0
        %440 = vmatprep.subr.mxu0 0.0
        %441 = vmatpush1.msra.mxu0 0.0
        %442 = vmatprep.subr.mxu0 0.0
        %443 = vmatpush1.msra.mxu0 0.0
        %444 = vmatprep.subr.mxu0 0.0
        %445 = vmatpush1.msra.mxu0 0.0
        %446 = vmatprep.subr.mxu0 0.0
        %447 = vmatpush1.msra.mxu0 0.0
        %448 = vmatprep.subr.mxu0 0.0
        %449 = vmatpush1.msra.mxu0 0.0
        %450 = vmatprep.subr.mxu0 0.0
        %451 = vmatpush1.msra.mxu0 0.0
        %452 = vmatprep.subr.mxu0 0.0
        %453 = vmatpush1.msra.mxu0 0.0
        %454 = vmatprep.mubr.f32.mxu0 0.0
        %455 = vmatmul.mubr.f32.gmra.mrb[0].mxu0 %v385
        %v456 = vpop.f32.mrb[0].mxu0
        %v457 = vadd.f32 %v376, %v456
        %v458 = vpop.f32.mrb[0].mxu0
        %v459 = vadd.f32 %v380, %v458
        %460 = vmatprep.mubr.f32.mxu0 0.0
        %461 = vmatmul.mubr.f32.gmra.mrb[0].mxu0 %v388
        %v462 = vpop.f32.mrb[0].mxu0
        %v463 = vadd.f32 %v376, %v462
        %v464 = vpop.f32.mrb[0].mxu0
        %v465 = vadd.f32 %v380, %v464
        %466 = vdwg.mxu0
        %v467 = vmax.f32 %v457, %v463
        %v468 = vrot.slane %v467, 4
        %v469 = vmax.f32 %v467, %v468
        %v470 = vrot.slane %v469, 2
        %v471 = vmax.f32 %v469, %v470
        %v472 = vrot.slane %v471, 1
        %v473 = vmax.f32 %v471, %v472
        %v474 = vmax.f32 %v459, %v465
        %v475 = vrot.slane %v474, 4
        %v476 = vmax.f32 %v474, %v475
        %v477 = vrot.slane %v476, 2
        %v478 = vmax.f32 %v476, %v477
        %v479 = vrot.slane %v478, 1
        %v480 = vmax.f32 %v478, %v479
        %v481 = vsub.f32 %v457, %v473
        %v482 = vsub.f32 %v459, %v480
        %v483 = vsub.f32 %v463, %v473
        %v484 = vsub.f32 %v465, %v480
        %v485 = vmul.f32 %v481, 1.442695
        %v486 = vpow.pop %v485
        %v487 = vmul.f32 %v482, 1.442695
        %v488 = vpow.pop %v487
        %v489 = vmul.f32 %v483, 1.442695
        %v490 = vpow.pop %v489
        %v491 = vmul.f32 %v484, 1.442695
        %v492 = vpow.pop %v491
        %v493 = vadd.f32 %v486, %v490
        %v494 = vrot.slane %v493, 4
        %v495 = vadd.f32 %v493, %v494
        %v496 = vrot.slane %v495, 2
        %v497 = vadd.f32 %v495, %v496
        %v498 = vrot.slane %v497, 1
        %v499 = vadd.f32 %v497, %v498
        %v500 = vadd.f32 %v488, %v492
        %v501 = vrot.slane %v500, 4
        %v502 = vadd.f32 %v500, %v501
        %v503 = vrot.slane %v502, 2
        %v504 = vadd.f32 %v502, %v503
        %v505 = vrot.slane %v504, 1
        %v506 = vadd.f32 %v504, %v505
        %v507 = vrcp.pop %v499
        %v508 = vmul.f32 %v486, %v507
        %v509 = vrcp.pop %v506
        %v510 = vmul.f32 %v488, %v509
        %v511 = vmul.f32 %v490, %v507
        %v512 = vmul.f32 %v492, %v509
        %v513 = vmul.f32 %v243, %v508
        %v514 = vmul.f32 %v244, %v510
        %v515 = vmul.f32 %v245, %v511
        %v516 = vmul.f32 %v246, %v512
        %v517 = vadd.f32 %v513, %v515
        %v518 = vrot.slane %v517, 4
        %v519 = vadd.f32 %v517, %v518
        %v520 = vrot.slane %v519, 2
        %v521 = vadd.f32 %v519, %v520
        %v522 = vrot.slane %v521, 1
        %v523 = vadd.f32 %v521, %v522
        %v524 = vadd.f32 %v514, %v516
        %v525 = vrot.slane %v524, 4
        %v526 = vadd.f32 %v524, %v525
        %v527 = vrot.slane %v526, 2
        %v528 = vadd.f32 %v526, %v527
        %v529 = vrot.slane %v528, 1
        %v530 = vadd.f32 %v528, %v529
        %v531 = vmul.f32 %v243, %v243
        %v532 = vmul.f32 %v244, %v244
        %v533 = vmul.f32 %v245, %v245
        %v534 = vmul.f32 %v246, %v246
        %v535 = vmul.f32 %v531, %v508
        %v536 = vmul.f32 %v532, %v510
        %v537 = vmul.f32 %v533, %v511
        %v538 = vmul.f32 %v534, %v512
        %v539 = vadd.f32 %v535, %v537
        %v540 = vrot.slane %v539, 4
        %v541 = vadd.f32 %v539, %v540
        %v542 = vrot.slane %v541, 2
        %v543 = vadd.f32 %v541, %v542
        %v544 = vrot.slane %v543, 1
        %v545 = vadd.f32 %v543, %v544
        %v546 = vadd.f32 %v536, %v538
        %v547 = vrot.slane %v546, 4
        %v548 = vadd.f32 %v546, %v547
        %v549 = vrot.slane %v548, 2
        %v550 = vadd.f32 %v548, %v549
        %v551 = vrot.slane %v550, 1
        %v552 = vadd.f32 %v550, %v551
        %v553 = vmul.f32 %v523, %v523
        %v554 = vmul.f32 %v530, %v530
        %v555 = vsub.f32 %v545, %v553
        %v556 = vsub.f32 %v552, %v554
        %v557 = vmax.f32 %v555, 1e-05
        %v558 = vmax.f32 %v556, 1e-05
        %v559 = vrsqrt.pop %v557
        %v560 = vmul.f32 %v557, %v559
        %vm561 = vcmp.eq.f32.partialorder %v557, inf
        %v562 = vsel %vm561, %v557, %v560
        %vm563 = vcmp.eq.f32.partialorder %v557, 0.0
        %v564 = vand.u32 %v557, 2147483648
        %v565 = vsel %vm563, %v564, %v562
        %v566 = vrsqrt.pop %v558
        %v567 = vmul.f32 %v558, %v566
        %vm568 = vcmp.eq.f32.partialorder %v558, inf
        %v569 = vsel %vm568, %v558, %v567
        %vm570 = vcmp.eq.f32.partialorder %v558, 0.0
        %v571 = vand.u32 %v558, 2147483648
        %v572 = vsel %vm570, %v571, %v569
        %vm573 = vcmask 1040384
        %v574 = vsel %vm573, %v523, %v565
        %v575 = vsel %vm573, %v530, %v572
        %v578 = vcombine.low %v574, %v575
        %v580 = vunpack.c.l.s4 1983009808
        %v581 = vunpack.c.0.s8 %v580
        %v582 = vlaneseq
        %v583 = vshrl.u32 %v582, 7
        %v584 = vsub.s32 %v581, %v583
        %v585 = vrot.slane %v578, %v584
        %587 = vst [vmem:[%s242] sm:$0xf] %v585
        %s588 = sand.u32 %s140, 1
        %s589 = scalar_lea.sflag [#allocation4], %s588
        %s590 = sand.u32 %s140, 1
        %s591 = smul.addr %s590, 4
        %s592 = scalar_lea.vmem [#allocation5], %s591
        // Predicated region
        $region45: #{tpu_custom_call.1} parent=39 // pred_check
          %p593 = pneg %p150
        $region46: #{tpu_custom_call.1} parent=39 // pred_check_branch
          %595 = sbr.rel (%p593) target = $region48
        $region47: #{tpu_custom_call.1} parent=39 // pred_region
          %s597 = ssub.s32 64, 64
          %598 = vsyncadd %s589, %s597
          %s599 = smul.addr %s22, 2
          %s600 = smul.addr %s599, 32
          %s601 = scalar_lea.hbm %s5, %s600
          %s603 = sshll.u32 %s592, 4
          %s604 = int_to_ptr.vmem [resolvable:$true] %s603
          %606 = dma.vmem_to_hbm [thread:$0]  %s604, 64, %s601, %s589
        $region48: #{tpu_custom_call.1} parent=39 // pred_fallthru
          _
      $region40: #{tpu_custom_call.1} parent=5 // pred_fallthru
        _
      %p607 = scmp.le.s32.totalorder 2, %s17
      // Predicated region
      $region49: #{tpu_custom_call.1} parent=5 // pred_check
        %p608 = pneg %p607
      $region50: #{tpu_custom_call.1} parent=5 // pred_check_branch
        %610 = sbr.rel (%p608) target = $region52
      $region51: #{tpu_custom_call.1} parent=5 // pred_region
        %s611 = ssub.s32 %s17, 2
        // Predicated region
        $region53: #{tpu_custom_call.1} parent=51 // pred_check
          %p612 = pneg %p156
        $region54: #{tpu_custom_call.1} parent=51 // pred_check_branch
          %614 = sbr.rel (%p612) target = $region56
        $region55: #{tpu_custom_call.1} parent=51 // pred_region
          %s615 = sand.u32 %s141, 1
          %s616 = scalar_lea.sflag [#allocation4], %s615
          %s617 = sand.u32 %s141, 1
          %s618 = smul.addr %s617, 4
          %s619 = scalar_lea.vmem [#allocation5], %s618
          %620 = dma.done %s616, 64
        $region56: #{tpu_custom_call.1} parent=51 // pred_fallthru
          _
      $region52: #{tpu_custom_call.1} parent=5 // pred_fallthru
        _
    $region6: #{tpu_custom_call.1} parent=1 // loop_footer
      %s21 = sadd.s32 1, %s17
    $region7: #{tpu_custom_call.1} parent=1 // loop_footer_branch
      %16 = sbr.rel target = $region3
    $region8: #{tpu_custom_call.1} parent=1 // loop_exit
      _
    %621 = vsyncpa [#allocation3], 1
    %s622 = scalar_lea.sflag [#allocation3], 1
    %623 = vsyncpa %s622, 1
    %624 = vsyncpa [#allocation4], 1
    %s625 = scalar_lea.sflag [#allocation4], 1
    %626 = vsyncpa %s625, 1

</llo_original>
